<compile_context>
chip_gen: v7x
topology: tpu7x:2x2x1
jax: 0.10.0
libtpu: 0.0.40
codegen_flags: <defaults>
</compile_context>

<pallas_src>
import functools

import jax
import jax.numpy as jnp
from jax.experimental import pallas as pl
from jax.experimental.pallas import tpu as pltpu

H1, H2, NUM_CLASS = 768, 128, 3
DEFAULT_TB = 2048          # max batch-tile rows per grid step


def mlp_kernel(x_ref, w1_ref, b1_ref, w2_ref, b2_ref, o_ref):
    # x: (TB, H1) bf16 ; w1: (H1, H2) bf16 ; b1: (1, H2) f32
    # w2: (H2, NUM_CLASS) f32 ; b2: (1, NUM_CLASS) f32 ; o: (TB, NUM_CLASS) f32
    h = jnp.dot(x_ref[...], w1_ref[...], preferred_element_type=jnp.float32)
    h = jnp.maximum(h + b1_ref[...], 0.0)                      # bias + ReLU, f32
    o_ref[...] = (
        jnp.dot(h, w2_ref[...], preferred_element_type=jnp.float32) + b2_ref[...]
    )


def pack_params(w1, b1, w2, b2):
    """One-time weight repacking (hoisted out of the per-call hot path).

    Inputs use PyTorch nn.Linear layout: w1 (H2, H1), b1 (H2,),
    w2 (NUM_CLASS, H2), b2 (NUM_CLASS,).  Returns kernel-layout params.
    """
    w1_t = w1.T.astype(jnp.bfloat16)                 # (H1, H2) bf16 MXU operand
    b1_r = b1.reshape(1, H2).astype(jnp.float32)     # (1, H2) f32
    w2_t = w2.T.astype(jnp.float32)                  # (H2, NUM_CLASS) f32 (tiny)
    b2_r = b2.reshape(1, NUM_CLASS).astype(jnp.float32)
    return w1_t, b1_r, w2_t, b2_r


def _cdiv(a, b):
    return -(-a // b)


def _round_up(x, m):
    return ((x + m - 1) // m) * m


def _choose_tiling(B, tb):
    """Balanced batch tiling.

    Bounds padding to < one sublane (8 rows) per tile instead of up to a full
    tb, and for B >= 512 guarantees >= 2 grid steps so dimension_semantics
    ("parallel",) can shard the batch axis across both TensorCores on v7x.
    """
    n = _cdiv(B, tb)
    if n < 2 and B >= 512:
        n = 2
    tb_eff = _round_up(_cdiv(B, n), 8)
    return n, tb_eff, n * tb_eff


@functools.partial(jax.jit, static_argnames=("tb",))
def classifier_forward_packed(emb, w1_t, b1_r, w2_t, b2_r, *, tb=DEFAULT_TB):
    """emb: (B, H1), f32 or bf16.  Packed params from pack_params().
    Returns (B, NUM_CLASS) f32 logits."""
    B = emb.shape[0]
    n_steps, tb_eff, B_pad = _choose_tiling(B, tb)

    # bf16 MXU operand.  No-op if the caller already supplies bf16 embeddings
    # (preferred: halves the dominant HBM read).  allow_input_fusion on this
    # operand lets XLA fuse the convert (and pad) into the Pallas input DMA
    # rather than materializing a separate HBM copy.
    emb = emb.astype(jnp.bfloat16)
    if B_pad != B:
        emb = jnp.pad(emb, ((0, B_pad - B), (0, 0)))  # padded rows sliced off below

    flops = 2 * B_pad * H1 * H2 + 2 * B_pad * H2 * NUM_CLASS
    bytes_accessed = (
        B_pad * H1 * 2                      # bf16 emb read
        + B_pad * NUM_CLASS * 4             # f32 logits write (12 B/row)
        + H1 * H2 * 2 + H2 * NUM_CLASS * 4  # weights
        + (H2 + NUM_CLASS) * 4              # biases
    )

    out = pl.pallas_call(
        mlp_kernel,
        out_shape=jax.ShapeDtypeStruct((B_pad, NUM_CLASS), jnp.float32),
        grid_spec=pltpu.PrefetchScalarGridSpec(
            num_scalar_prefetch=0,
            grid=(n_steps,),
            in_specs=[
                # emb is streamed in tb_eff-row tiles (double buffered by the
                # Pallas pipeline; pipeline_mode=pl.Buffered(3) is an optional
                # sweep for this DMA-exposed pipeline).
                pl.BlockSpec((tb_eff, H1), lambda i: (i, 0)),
                # Weights/biases: constant index_map -> resident in VMEM.
                pl.BlockSpec((H1, H2), lambda i: (0, 0)),
                pl.BlockSpec((1, H2), lambda i: (0, 0)),
                pl.BlockSpec((H2, NUM_CLASS), lambda i: (0, 0)),
                pl.BlockSpec((1, NUM_CLASS), lambda i: (0, 0)),
            ],
            out_specs=pl.BlockSpec((tb_eff, NUM_CLASS), lambda i: (i, 0)),
        ),
        compiler_params=pltpu.CompilerParams(
            dimension_semantics=("parallel",),
            allow_input_fusion=[True, False, False, False, False],
            vmem_limit_bytes=32 * 1024 * 1024,
        ),
        cost_estimate=pl.CostEstimate(
            flops=flops, transcendentals=0, bytes_accessed=bytes_accessed),
    )(emb, w1_t, b1_r, w2_t, b2_r)

    return out if B_pad == B else out[:B]


def classifier_forward(emb, w1, b1, w2, b2, *, tb=DEFAULT_TB):
    """Convenience wrapper taking raw PyTorch-layout weights (packs per call).
    For repeated use, call pack_params() once and use classifier_forward_packed."""
    packed = pack_params(w1, b1, w2, b2)
    return classifier_forward_packed(emb, *packed, tb=tb)


def _init_params(key):
    """Deterministic synthetic init matching nn.Linear parameter shapes."""
    k1, k2, k3, k4 = jax.random.split(key, 4)
    lim1 = 1.0 / (H1 ** 0.5)
    lim2 = 1.0 / (H2 ** 0.5)
    w1 = jax.random.uniform(k1, (H2, H1), jnp.float32, -lim1, lim1)   # (out, in)
    b1 = jax.random.uniform(k2, (H2,), jnp.float32, -lim1, lim1)
    w2 = jax.random.uniform(k3, (NUM_CLASS, H2), jnp.float32, -lim2, lim2)
    b2 = jax.random.uniform(k4, (NUM_CLASS,), jnp.float32, -lim2, lim2)
    return w1, b1, w2, b2


if __name__ == "__main__":
    key = jax.random.PRNGKey(0)
    k_emb, k_params = jax.random.split(key)

    B = 16
    emb = jax.random.normal(k_emb, (B, H1), jnp.float32)
    w1, b1, w2, b2 = _init_params(k_params)

    # Hoisted, one-time weight packing (the hot path only runs the kernel).
    packed = pack_params(w1, b1, w2, b2)
    logits = classifier_forward_packed(emb, *packed)
    logits = jax.block_until_ready(logits)

    # Pure-JAX f32 reference (same math as the PyTorch forward).  Only the
    # bf16 ingest of emb / w1 differs from full f32, so the tolerance is loose
    # but tighter than before (hidden activations now stay f32).
    h_ref = jnp.maximum(emb @ w1.T + b1, 0.0)
    logits_ref = h_ref @ w2.T + b2
    assert logits.shape == (B, NUM_CLASS)
    assert jnp.allclose(logits, logits_ref, atol=3e-2, rtol=3e-2)

    print("KERNEL_OK")
</pallas_src>

<mosaic_0001>
module attributes {stable_mosaic.version = 11 : i64} {
  func.func @mlp_kernel(%arg0: i32, %arg1: memref<16x768xbf16, #tpu.memory_space<vmem>>, %arg2: memref<768x128xbf16, #tpu.memory_space<vmem>>, %arg3: memref<1x128xf32, #tpu.memory_space<vmem>>, %arg4: memref<128x3xf32, #tpu.memory_space<vmem>>, %arg5: memref<1x3xf32, #tpu.memory_space<vmem>>, %arg6: memref<16x3xf32, #tpu.memory_space<vmem>>) attributes {dimension_semantics = [#tpu.dimension_semantics<parallel>], iteration_bounds = array<i64: 1>, scalar_prefetch = 0 : i64, scratch_operands = 0 : i64, tpu.core_type = #tpu.core_type<tc>, window_params = [{transform_indices = @transform_0, window_bounds = array<i64: 16, 768>}, {pipeline_mode = #tpu.pipeline_mode<synchronous>, transform_indices = @transform_1, window_bounds = array<i64: 768, 128>}, {pipeline_mode = #tpu.pipeline_mode<synchronous>, transform_indices = @transform_2, window_bounds = array<i64: 1, 128>}, {pipeline_mode = #tpu.pipeline_mode<synchronous>, transform_indices = @transform_3, window_bounds = array<i64: 128, 3>}, {pipeline_mode = #tpu.pipeline_mode<synchronous>, transform_indices = @transform_4, window_bounds = array<i64: 1, 3>}, {transform_indices = @transform_5, window_bounds = array<i64: 16, 3>}]} {
    %c0 = arith.constant 0 : index
    %c0_0 = arith.constant 0 : index
    %0 = vector.load %arg1[%c0, %c0_0] : memref<16x768xbf16, #tpu.memory_space<vmem>>, vector<16x768xbf16>
    %c0_1 = arith.constant 0 : index
    %c0_2 = arith.constant 0 : index
    %1 = vector.load %arg2[%c0_1, %c0_2] : memref<768x128xbf16, #tpu.memory_space<vmem>>, vector<768x128xbf16>
    %cst = arith.constant dense<0.000000e+00> : vector<16x128xf32>
    %2 = tpu.matmul %0, %1, %cst {dimension_numbers = #tpu.dot_dimension_numbers<[1], [0], [0], [1], [0, 0, 1, 1], [], []>} : vector<16x768xbf16>, vector<768x128xbf16>, vector<16x128xf32> -> vector<16x128xf32>
    %c0_3 = arith.constant 0 : index
    %c0_4 = arith.constant 0 : index
    %3 = vector.load %arg3[%c0_3, %c0_4] : memref<1x128xf32, #tpu.memory_space<vmem>>, vector<1x128xf32>
    %4 = vector.broadcast %3 : vector<1x128xf32> to vector<16x128xf32>
    %5 = arith.addf %2, %4 : vector<16x128xf32>
    %cst_5 = arith.constant 0.000000e+00 : f32
    %6 = vector.broadcast %cst_5 : f32 to vector<16x128xf32>
    %7 = arith.maximumf %5, %6 : vector<16x128xf32>
    %c0_6 = arith.constant 0 : index
    %c0_7 = arith.constant 0 : index
    %8 = vector.load %arg4[%c0_6, %c0_7] : memref<128x3xf32, #tpu.memory_space<vmem>>, vector<128x3xf32>
    %cst_8 = arith.constant dense<0.000000e+00> : vector<16x3xf32>
    %9 = tpu.matmul %7, %8, %cst_8 {dimension_numbers = #tpu.dot_dimension_numbers<[1], [0], [0], [1], [0, 0, 1, 1], [], []>} : vector<16x128xf32>, vector<128x3xf32>, vector<16x3xf32> -> vector<16x3xf32>
    %c0_9 = arith.constant 0 : index
    %c0_10 = arith.constant 0 : index
    %10 = vector.load %arg5[%c0_9, %c0_10] : memref<1x3xf32, #tpu.memory_space<vmem>>, vector<1x3xf32>
    %11 = vector.broadcast %10 : vector<1x3xf32> to vector<16x3xf32>
    %12 = arith.addf %9, %11 : vector<16x3xf32>
    %c0_11 = arith.constant 0 : index
    %c0_12 = arith.constant 0 : index
    %13 = vector.load %arg6[%c0_11, %c0_12] : memref<16x3xf32, #tpu.memory_space<vmem>>, vector<16x3xf32>
    tpu.vector_store %arg6[%c0_11, %c0_12], %12 {strides = array<i32>} : memref<16x3xf32, #tpu.memory_space<vmem>>, vector<16x3xf32>,
    return
  }
  func.func @transform_0(%arg0: i32) -> (i32, i32) {
    %c0_i32 = arith.constant 0 : i32
    %c0_i32_0 = arith.constant 0 : i32
    return %arg0, %c0_i32 : i32, i32
  }
  func.func @transform_1(%arg0: i32) -> (i32, i32) {
    %c0_i32 = arith.constant 0 : i32
    %c0_i32_0 = arith.constant 0 : i32
    %c0_i32_1 = arith.constant 0 : i32
    return %c0_i32, %c0_i32_0 : i32, i32
  }
  func.func @transform_2(%arg0: i32) -> (i32, i32) {
    %c0_i32 = arith.constant 0 : i32
    %c0_i32_0 = arith.constant 0 : i32
    %c0_i32_1 = arith.constant 0 : i32
    return %c0_i32, %c0_i32_0 : i32, i32
  }
  func.func @transform_3(%arg0: i32) -> (i32, i32) {
    %c0_i32 = arith.constant 0 : i32
    %c0_i32_0 = arith.constant 0 : i32
    %c0_i32_1 = arith.constant 0 : i32
    return %c0_i32, %c0_i32_0 : i32, i32
  }
  func.func @transform_4(%arg0: i32) -> (i32, i32) {
    %c0_i32 = arith.constant 0 : i32
    %c0_i32_0 = arith.constant 0 : i32
    %c0_i32_1 = arith.constant 0 : i32
    return %c0_i32, %c0_i32_0 : i32, i32
  }
  func.func @transform_5(%arg0: i32) -> (i32, i32) {
    %c0_i32 = arith.constant 0 : i32
    %c0_i32_0 = arith.constant 0 : i32
    return %arg0, %c0_i32 : i32, i32
  }
}

</mosaic_0001>

<llo_original>
// kernel: classifier_forward_packed.2
$region0: #{classifier_forward_packed.2}
  #allocation0 [shape = 'u32[]', space=smem, size = 0x4, offset = 0x4, fixed_abs, tag = 'smem constant byte address 0x4 - core index']
  #allocation1 [shape = 'u32[144,128]{1,0:T(1,128)}', space=vmem, size = 0x12000, scoped, tag = 'internal scratch']
  %s0 = inlined_call_operand.hbm [shape: bf16[768,128], index: 0, kind: input, shape index: {}]
  %s1 = inlined_call_operand.vmem [shape: f32[1,128], index: 1, kind: input, shape index: {}]
  %s2 = inlined_call_operand.vmem [shape: f32[128,3], index: 2, kind: input, shape index: {}]
  %s3 = inlined_call_operand.vmem [shape: f32[1,3], index: 3, kind: input, shape index: {}]
  %s4 = inlined_call_operand.vmem [shape: f32[16,768], index: 4, kind: input, shape index: {}]
  %s5 = inlined_call_operand.vmem [shape: f32[16,3], index: 5, kind: output, shape index: {}]
  %s6 = sld [smem:[#allocation0]]
  $region34: #{classifier_forward_packed.2} parent=0
    _
  %s8 = ssub.s32 1, %s6
  %s9 = scalar_select 0, %s8, %s6
  $region1: #{classifier_forward_packed.2} parent=0
    #allocation2 [shape = 'u8[196608]{0}', space=vmem, size = 0x30000, scoped, tag = 'input window, operand 1, single buffered']
    #allocation3 [shape = 's32[1]{0}', space=sflag, size = 0x4, scoped, tag = 'scoped memory for classifier_forward_packed.2']
    #allocation4 [shape = 'u8[24576]{0}', space=vmem, size = 0x6000, dematerialized = true, scoped, tag = 'FusionAdapter Buffer %fusion.1 = bf16[16,768]{1,0:T(8,128)(2,1)} fusion(%param_4.1), kind=kLoop, calls=%fused_computation.1.clone, metadata={op_name="jit(classifier_forward_packed)/convert_element_type" stack_frame_id=7}']
    %10 = vsyncpa [#allocation3], 0
    // Predicated region
    $region2: #{classifier_forward_packed.2} parent=1 // pred_check
      _
    $region3: #{classifier_forward_packed.2} parent=1 // pred_check_branch
      %12 = sbr.rel (0) target = $region5
    $region4: #{classifier_forward_packed.2} parent=1 // pred_region
      _
    $region5: #{classifier_forward_packed.2} parent=1 // pred_fallthru
      _
    // Predicated region
    $region6: #{classifier_forward_packed.2} parent=1 // pred_check
      _
    $region7: #{classifier_forward_packed.2} parent=1 // pred_check_branch
      %14 = sbr.rel (0) target = $region9
    $region8: #{classifier_forward_packed.2} parent=1 // pred_region
      %s16 = ssub.s32 6144, 6144
      %17 = vsyncadd [#allocation3], %s16
      %s18 = sshll.u32 [#allocation2], 4
      %s19 = int_to_ptr.vmem [resolvable:$true] %s18
      %24 = dma.hbm_to_vmem [thread:$0]  %s0, 6144, %s19, [#allocation3], 64, 64, 4
    $region9: #{classifier_forward_packed.2} parent=1 // pred_fallthru
      _
    // Predicated region
    $region10: #{classifier_forward_packed.2} parent=1 // pred_check
      _
    $region11: #{classifier_forward_packed.2} parent=1 // pred_check_branch
      %26 = sbr.rel (0) target = $region13
    $region12: #{classifier_forward_packed.2} parent=1 // pred_region
      _
    $region13: #{classifier_forward_packed.2} parent=1 // pred_fallthru
      _
    // Predicated region
    $region14: #{classifier_forward_packed.2} parent=1 // pred_check
      _
    $region15: #{classifier_forward_packed.2} parent=1 // pred_check_branch
      %28 = sbr.rel (0) target = $region17
    $region16: #{classifier_forward_packed.2} parent=1 // pred_region
      _
    $region17: #{classifier_forward_packed.2} parent=1 // pred_fallthru
      _
    // Predicated region
    $region18: #{classifier_forward_packed.2} parent=1 // pred_check
      _
    $region19: #{classifier_forward_packed.2} parent=1 // pred_check_branch
      %30 = sbr.rel (0) target = $region21
    $region20: #{classifier_forward_packed.2} parent=1 // pred_region
      _
    $region21: #{classifier_forward_packed.2} parent=1 // pred_fallthru
      _
    // Predicated region
    $region22: #{classifier_forward_packed.2} parent=1 // pred_check
      _
    $region23: #{classifier_forward_packed.2} parent=1 // pred_check_branch
      %32 = sbr.rel (0) target = $region25
    $region24: #{classifier_forward_packed.2} parent=1 // pred_region
      %33 = dma.done [#allocation3], 6144
    $region25: #{classifier_forward_packed.2} parent=1 // pred_fallthru
      _
    %v34 = vld [vmem:[%s4] sm:$0xff]
    %35 = xla_tuple %v34
    %36 = xla_tuple %35
    %37 = xla_tuple %v34
    %v38 = vpack.c.bf16 0.0, %v34
    %40 = vst [vmem:[#allocation4] sm:$0xf] %v38
    %s41 = scalar_lea.vmem %s4, 8
    %v42 = vld [vmem:[%s41] sm:$0xff]
    %43 = xla_tuple %v42
    %44 = xla_tuple %43
    %45 = xla_tuple %v42
    %s46 = scalar_lea.vmem [#allocation4], 4
    %v47 = vpack.c.bf16 0.0, %v42
    %49 = vst [vmem:[%s46] sm:$0xf] %v47
    %s50 = scalar_lea.vmem %s4, 16
    %v51 = vld [vmem:[%s50] sm:$0xff]
    %52 = xla_tuple %v51
    %53 = xla_tuple %52
    %54 = xla_tuple %v51
    %s55 = scalar_lea.vmem [#allocation4], 8
    %v56 = vpack.c.bf16 0.0, %v51
    %58 = vst [vmem:[%s55] sm:$0xf] %v56
    %s59 = scalar_lea.vmem %s4, 24
    %v60 = vld [vmem:[%s59] sm:$0xff]
    %61 = xla_tuple %v60
    %62 = xla_tuple %61
    %63 = xla_tuple %v60
    %s64 = scalar_lea.vmem [#allocation4], 12
    %v65 = vpack.c.bf16 0.0, %v60
    %67 = vst [vmem:[%s64] sm:$0xf] %v65
    %s68 = scalar_lea.vmem %s4, 32
    %v69 = vld [vmem:[%s68] sm:$0xff]
    %70 = xla_tuple %v69
    %71 = xla_tuple %70
    %72 = xla_tuple %v69
    %s73 = scalar_lea.vmem [#allocation4], 16
    %v74 = vpack.c.bf16 0.0, %v69
    %76 = vst [vmem:[%s73] sm:$0xf] %v74
    %s77 = scalar_lea.vmem %s4, 40
    %v78 = vld [vmem:[%s77] sm:$0xff]
    %79 = xla_tuple %v78
    %80 = xla_tuple %79
    %81 = xla_tuple %v78
    %s82 = scalar_lea.vmem [#allocation4], 20
    %v83 = vpack.c.bf16 0.0, %v78
    %85 = vst [vmem:[%s82] sm:$0xf] %v83
    %s86 = scalar_lea.vmem %s4, 48
    %v87 = vld [vmem:[%s86] sm:$0xff]
    %88 = xla_tuple %v87
    %89 = xla_tuple %88
    %90 = xla_tuple %v87
    %s91 = scalar_lea.vmem [#allocation4], 24
    %v92 = vpack.c.bf16 0.0, %v87
    %94 = vst [vmem:[%s91] sm:$0xf] %v92
    %s95 = scalar_lea.vmem %s4, 56
    %v96 = vld [vmem:[%s95] sm:$0xff]
    %97 = xla_tuple %v96
    %98 = xla_tuple %97
    %99 = xla_tuple %v96
    %s100 = scalar_lea.vmem [#allocation4], 28
    %v101 = vpack.c.bf16 0.0, %v96
    %103 = vst [vmem:[%s100] sm:$0xf] %v101
    %s104 = scalar_lea.vmem %s4, 64
    %v105 = vld [vmem:[%s104] sm:$0xff]
    %106 = xla_tuple %v105
    %107 = xla_tuple %106
    %108 = xla_tuple %v105
    %s109 = scalar_lea.vmem [#allocation4], 32
    %v110 = vpack.c.bf16 0.0, %v105
    %112 = vst [vmem:[%s109] sm:$0xf] %v110
    %s113 = scalar_lea.vmem %s4, 72
    %v114 = vld [vmem:[%s113] sm:$0xff]
    %115 = xla_tuple %v114
    %116 = xla_tuple %115
    %117 = xla_tuple %v114
    %s118 = scalar_lea.vmem [#allocation4], 36
    %v119 = vpack.c.bf16 0.0, %v114
    %121 = vst [vmem:[%s118] sm:$0xf] %v119
    %s122 = scalar_lea.vmem %s4, 80
    %v123 = vld [vmem:[%s122] sm:$0xff]
    %124 = xla_tuple %v123
    %125 = xla_tuple %124
    %126 = xla_tuple %v123
    %s127 = scalar_lea.vmem [#allocation4], 40
    %v128 = vpack.c.bf16 0.0, %v123
    %130 = vst [vmem:[%s127] sm:$0xf] %v128
    %s131 = scalar_lea.vmem %s4, 88
    %v132 = vld [vmem:[%s131] sm:$0xff]
    %133 = xla_tuple %v132
    %134 = xla_tuple %133
    %135 = xla_tuple %v132
    %s136 = scalar_lea.vmem [#allocation4], 44
    %v137 = vpack.c.bf16 0.0, %v132
    %139 = vst [vmem:[%s136] sm:$0xf] %v137
    %v141 = vld [vmem:[#allocation4] sm:$0xff]
    %v142 = vld [vmem:[#allocation4 + $0x8] sm:$0xff]
    %v143 = vld [vmem:[#allocation4 + $0x10] sm:$0xff]
    %v144 = vld [vmem:[#allocation4 + $0x18] sm:$0xff]
    %v145 = vld [vmem:[#allocation4 + $0x20] sm:$0xff]
    %v146 = vld [vmem:[#allocation4 + $0x28] sm:$0xff]
    %v147 = vld [vmem:[#allocation2] sm:$0xf]
    %v148 = vld [vmem:[#allocation2 + $0x4] sm:$0xf]
    %v149 = vld [vmem:[#allocation2 + $0x8] sm:$0xf]
    %v150 = vld [vmem:[#allocation2 + $0xc] sm:$0xf]
    %v151 = vld [vmem:[#allocation2 + $0x10] sm:$0xf]
    %v152 = vld [vmem:[#allocation2 + $0x14] sm:$0xf]
    %v153 = vld [vmem:[#allocation2 + $0x18] sm:$0xf]
    %v154 = vld [vmem:[#allocation2 + $0x1c] sm:$0xf]
    %v155 = vld [vmem:[#allocation2 + $0x20] sm:$0xf]
    %v156 = vld [vmem:[#allocation2 + $0x24] sm:$0xf]
    %v157 = vld [vmem:[#allocation2 + $0x28] sm:$0xf]
    %v158 = vld [vmem:[#allocation2 + $0x2c] sm:$0xf]
    %v159 = vld [vmem:[#allocation2 + $0x30] sm:$0xf]
    %v160 = vld [vmem:[#allocation2 + $0x34] sm:$0xf]
    %v161 = vld [vmem:[#allocation2 + $0x38] sm:$0xf]
    %v162 = vld [vmem:[#allocation2 + $0x3c] sm:$0xf]
    %v163 = vld [vmem:[#allocation2 + $0x40] sm:$0xf]
    %v164 = vld [vmem:[#allocation2 + $0x44] sm:$0xf]
    %v165 = vld [vmem:[#allocation2 + $0x48] sm:$0xf]
    %v166 = vld [vmem:[#allocation2 + $0x4c] sm:$0xf]
    %v167 = vld [vmem:[#allocation2 + $0x50] sm:$0xf]
    %v168 = vld [vmem:[#allocation2 + $0x54] sm:$0xf]
    %v169 = vld [vmem:[#allocation2 + $0x58] sm:$0xf]
    %v170 = vld [vmem:[#allocation2 + $0x5c] sm:$0xf]
    %v171 = vld [vmem:[#allocation2 + $0x60] sm:$0xf]
    %v172 = vld [vmem:[#allocation2 + $0x64] sm:$0xf]
    %v173 = vld [vmem:[#allocation2 + $0x68] sm:$0xf]
    %v174 = vld [vmem:[#allocation2 + $0x6c] sm:$0xf]
    %v175 = vld [vmem:[#allocation2 + $0x70] sm:$0xf]
    %v176 = vld [vmem:[#allocation2 + $0x74] sm:$0xf]
    %v177 = vld [vmem:[#allocation2 + $0x78] sm:$0xf]
    %v178 = vld [vmem:[#allocation2 + $0x7c] sm:$0xf]
    %v179 = vld [vmem:[#allocation2 + $0x80] sm:$0xf]
    %v180 = vld [vmem:[#allocation2 + $0x84] sm:$0xf]
    %v181 = vld [vmem:[#allocation2 + $0x88] sm:$0xf]
    %v182 = vld [vmem:[#allocation2 + $0x8c] sm:$0xf]
    %v183 = vld [vmem:[#allocation2 + $0x90] sm:$0xf]
    %v184 = vld [vmem:[#allocation2 + $0x94] sm:$0xf]
    %v185 = vld [vmem:[#allocation2 + $0x98] sm:$0xf]
    %v186 = vld [vmem:[#allocation2 + $0x9c] sm:$0xf]
    %v187 = vld [vmem:[#allocation2 + $0xa0] sm:$0xf]
    %v188 = vld [vmem:[#allocation2 + $0xa4] sm:$0xf]
    %v189 = vld [vmem:[#allocation2 + $0xa8] sm:$0xf]
    %v190 = vld [vmem:[#allocation2 + $0xac] sm:$0xf]
    %v191 = vld [vmem:[#allocation2 + $0xb0] sm:$0xf]
    %v192 = vld [vmem:[#allocation2 + $0xb4] sm:$0xf]
    %v193 = vld [vmem:[#allocation2 + $0xb8] sm:$0xf]
    %v194 = vld [vmem:[#allocation2 + $0xbc] sm:$0xf]
    %v195 = vld [vmem:[#allocation2 + $0xc0] sm:$0xf]
    %v196 = vld [vmem:[#allocation2 + $0xc4] sm:$0xf]
    %v197 = vld [vmem:[#allocation2 + $0xc8] sm:$0xf]
    %v198 = vld [vmem:[#allocation2 + $0xcc] sm:$0xf]
    %v199 = vld [vmem:[#allocation2 + $0xd0] sm:$0xf]
    %v200 = vld [vmem:[#allocation2 + $0xd4] sm:$0xf]
    %v201 = vld [vmem:[#allocation2 + $0xd8] sm:$0xf]
    %v202 = vld [vmem:[#allocation2 + $0xdc] sm:$0xf]
    %v203 = vld [vmem:[#allocation2 + $0xe0] sm:$0xf]
    %v204 = vld [vmem:[#allocation2 + $0xe4] sm:$0xf]
    %v205 = vld [vmem:[#allocation2 + $0xe8] sm:$0xf]
    %v206 = vld [vmem:[#allocation2 + $0xec] sm:$0xf]
    %v207 = vld [vmem:[#allocation2 + $0xf0] sm:$0xf]
    %v208 = vld [vmem:[#allocation2 + $0xf4] sm:$0xf]
    %v209 = vld [vmem:[#allocation2 + $0xf8] sm:$0xf]
    %v210 = vld [vmem:[#allocation2 + $0xfc] sm:$0xf]
    %v211 = vld [vmem:[#allocation2 + $0x100] sm:$0xf]
    %v212 = vld [vmem:[#allocation2 + $0x104] sm:$0xf]
    %v213 = vld [vmem:[#allocation2 + $0x108] sm:$0xf]
    %v214 = vld [vmem:[#allocation2 + $0x10c] sm:$0xf]
    %v215 = vld [vmem:[#allocation2 + $0x110] sm:$0xf]
    %v216 = vld [vmem:[#allocation2 + $0x114] sm:$0xf]
    %v217 = vld [vmem:[#allocation2 + $0x118] sm:$0xf]
    %v218 = vld [vmem:[#allocation2 + $0x11c] sm:$0xf]
    %v219 = vld [vmem:[#allocation2 + $0x120] sm:$0xf]
    %v220 = vld [vmem:[#allocation2 + $0x124] sm:$0xf]
    %v221 = vld [vmem:[#allocation2 + $0x128] sm:$0xf]
    %v222 = vld [vmem:[#allocation2 + $0x12c] sm:$0xf]
    %v223 = vld [vmem:[#allocation2 + $0x130] sm:$0xf]
    %v224 = vld [vmem:[#allocation2 + $0x134] sm:$0xf]
    %v225 = vld [vmem:[#allocation2 + $0x138] sm:$0xf]
    %v226 = vld [vmem:[#allocation2 + $0x13c] sm:$0xf]
    %v227 = vld [vmem:[#allocation2 + $0x140] sm:$0xf]
    %v228 = vld [vmem:[#allocation2 + $0x144] sm:$0xf]
    %v229 = vld [vmem:[#allocation2 + $0x148] sm:$0xf]
    %v230 = vld [vmem:[#allocation2 + $0x14c] sm:$0xf]
    %v231 = vld [vmem:[#allocation2 + $0x150] sm:$0xf]
    %v232 = vld [vmem:[#allocation2 + $0x154] sm:$0xf]
    %v233 = vld [vmem:[#allocation2 + $0x158] sm:$0xf]
    %v234 = vld [vmem:[#allocation2 + $0x15c] sm:$0xf]
    %v235 = vld [vmem:[#allocation2 + $0x160] sm:$0xf]
    %v236 = vld [vmem:[#allocation2 + $0x164] sm:$0xf]
    %v237 = vld [vmem:[#allocation2 + $0x168] sm:$0xf]
    %v238 = vld [vmem:[#allocation2 + $0x16c] sm:$0xf]
    %v239 = vld [vmem:[#allocation2 + $0x170] sm:$0xf]
    %v240 = vld [vmem:[#allocation2 + $0x174] sm:$0xf]
    %v241 = vld [vmem:[#allocation2 + $0x178] sm:$0xf]
    %v242 = vld [vmem:[#allocation2 + $0x17c] sm:$0xf]
    %v243 = vld [vmem:[%s1] sm:$0x1]
    %v245 = vlaneseq
    %v246 = vshrl.u32 %v245, 7
    %v247 = vsub.s32 0, %v246
    %v248 = vrot.slane %v243, %v247
    %v256 = vunpack.c.l.b16 %v141
    %v257 = vunpack.c.h.b16 %v141
    %v258 = vunpack.c.l.b16 %v142
    %v259 = vunpack.c.h.b16 %v142
    %v260 = vunpack.c.l.b16 %v143
    %v261 = vunpack.c.h.b16 %v143
    %v262 = vunpack.c.l.b16 %v144
    %v263 = vunpack.c.h.b16 %v144
    %v264 = vunpack.c.l.b16 %v145
    %v265 = vunpack.c.h.b16 %v145
    %v266 = vunpack.c.l.b16 %v146
    %v267 = vunpack.c.h.b16 %v146
    %v268 = vpack.c.b16 %v262, %v256
    %v269 = vpack.c.b16 %v263, %v257
    %v270 = vpack.c.b16 %v264, %v258
    %v271 = vpack.c.b16 %v265, %v259
    %v272 = vpack.c.b16 %v266, %v260
    %v273 = vpack.c.b16 %v267, %v261
    %v376 = vunpack.c.l.b16 %v147
    %v377 = vunpack.c.l.b16 %v148
    %v378 = vunpack.c.l.b16 %v149
    %v379 = vunpack.c.l.b16 %v150
    %v380 = vunpack.c.l.b16 %v151
    %v381 = vunpack.c.l.b16 %v152
    %v382 = vunpack.c.l.b16 %v153
    %v383 = vunpack.c.l.b16 %v154
    %v384 = vunpack.c.l.b16 %v155
    %v385 = vunpack.c.l.b16 %v156
    %v386 = vunpack.c.l.b16 %v157
    %v387 = vunpack.c.l.b16 %v158
    %v388 = vunpack.c.l.b16 %v159
    %v389 = vunpack.c.l.b16 %v160
    %v390 = vunpack.c.l.b16 %v161
    %v391 = vunpack.c.l.b16 %v162
    %v392 = vunpack.c.l.b16 %v163
    %v393 = vunpack.c.l.b16 %v164
    %v394 = vunpack.c.l.b16 %v165
    %v395 = vunpack.c.l.b16 %v166
    %v396 = vunpack.c.l.b16 %v167
    %v397 = vunpack.c.l.b16 %v168
    %v398 = vunpack.c.l.b16 %v169
    %v399 = vunpack.c.l.b16 %v170
    %v400 = vunpack.c.l.b16 %v171
    %v401 = vunpack.c.l.b16 %v172
    %v402 = vunpack.c.l.b16 %v173
    %v403 = vunpack.c.l.b16 %v174
    %v404 = vunpack.c.l.b16 %v175
    %v405 = vunpack.c.l.b16 %v176
    %v406 = vunpack.c.l.b16 %v177
    %v407 = vunpack.c.l.b16 %v178
    %v408 = vunpack.c.l.b16 %v179
    %v409 = vunpack.c.l.b16 %v180
    %v410 = vunpack.c.l.b16 %v181
    %v411 = vunpack.c.l.b16 %v182
    %v412 = vunpack.c.l.b16 %v183
    %v413 = vunpack.c.l.b16 %v184
    %v414 = vunpack.c.l.b16 %v185
    %v415 = vunpack.c.l.b16 %v186
    %v416 = vunpack.c.l.b16 %v187
    %v417 = vunpack.c.l.b16 %v188
    %v418 = vunpack.c.l.b16 %v189
    %v419 = vunpack.c.l.b16 %v190
    %v420 = vunpack.c.l.b16 %v191
    %v421 = vunpack.c.l.b16 %v192
    %v422 = vunpack.c.l.b16 %v193
    %v423 = vunpack.c.l.b16 %v194
    %v424 = vunpack.c.l.b16 %v195
    %v425 = vunpack.c.l.b16 %v196
    %v426 = vunpack.c.l.b16 %v197
    %v427 = vunpack.c.l.b16 %v198
    %v428 = vunpack.c.l.b16 %v199
    %v429 = vunpack.c.l.b16 %v200
    %v430 = vunpack.c.l.b16 %v201
    %v431 = vunpack.c.l.b16 %v202
    %v432 = vunpack.c.l.b16 %v203
    %v433 = vunpack.c.l.b16 %v204
    %v434 = vunpack.c.l.b16 %v205
    %v435 = vunpack.c.l.b16 %v206
    %v436 = vunpack.c.l.b16 %v207
    %v437 = vunpack.c.l.b16 %v208
    %v438 = vunpack.c.l.b16 %v209
    %v439 = vunpack.c.l.b16 %v210
    %v440 = vunpack.c.l.b16 %v211
    %v441 = vunpack.c.l.b16 %v212
    %v442 = vunpack.c.l.b16 %v213
    %v443 = vunpack.c.l.b16 %v214
    %v444 = vunpack.c.l.b16 %v215
    %v445 = vunpack.c.l.b16 %v216
    %v446 = vunpack.c.l.b16 %v217
    %v447 = vunpack.c.l.b16 %v218
    %v448 = vunpack.c.l.b16 %v219
    %v449 = vunpack.c.l.b16 %v220
    %v450 = vunpack.c.l.b16 %v221
    %v451 = vunpack.c.l.b16 %v222
    %v452 = vunpack.c.l.b16 %v223
    %v453 = vunpack.c.l.b16 %v224
    %v454 = vunpack.c.l.b16 %v225
    %v455 = vunpack.c.l.b16 %v226
    %v456 = vunpack.c.l.b16 %v227
    %v457 = vunpack.c.l.b16 %v228
    %v458 = vunpack.c.l.b16 %v229
    %v459 = vunpack.c.l.b16 %v230
    %v460 = vunpack.c.l.b16 %v231
    %v461 = vunpack.c.l.b16 %v232
    %v462 = vunpack.c.l.b16 %v233
    %v463 = vunpack.c.l.b16 %v234
    %v464 = vunpack.c.l.b16 %v235
    %v465 = vunpack.c.l.b16 %v236
    %v466 = vunpack.c.l.b16 %v237
    %v467 = vunpack.c.l.b16 %v238
    %v468 = vunpack.c.l.b16 %v239
    %v469 = vunpack.c.l.b16 %v240
    %v470 = vunpack.c.l.b16 %v241
    %v471 = vunpack.c.l.b16 %v242
    %v472 = vpack.c.b16 %v377, %v376
    %v473 = vpack.c.b16 %v379, %v378
    %v474 = vpack.c.b16 %v381, %v380
    %v475 = vpack.c.b16 %v383, %v382
    %v476 = vpack.c.b16 %v385, %v384
    %v477 = vpack.c.b16 %v387, %v386
    %v478 = vpack.c.b16 %v389, %v388
    %v479 = vpack.c.b16 %v391, %v390
    %v480 = vpack.c.b16 %v393, %v392
    %v481 = vpack.c.b16 %v395, %v394
    %v482 = vpack.c.b16 %v397, %v396
    %v483 = vpack.c.b16 %v399, %v398
    %v484 = vpack.c.b16 %v401, %v400
    %v485 = vpack.c.b16 %v403, %v402
    %v486 = vpack.c.b16 %v405, %v404
    %v487 = vpack.c.b16 %v407, %v406
    %v488 = vpack.c.b16 %v409, %v408
    %v489 = vpack.c.b16 %v411, %v410
    %v490 = vpack.c.b16 %v413, %v412
    %v491 = vpack.c.b16 %v415, %v414
    %v492 = vpack.c.b16 %v417, %v416
    %v493 = vpack.c.b16 %v419, %v418
    %v494 = vpack.c.b16 %v421, %v420
    %v495 = vpack.c.b16 %v423, %v422
    %v496 = vpack.c.b16 %v425, %v424
    %v497 = vpack.c.b16 %v427, %v426
    %v498 = vpack.c.b16 %v429, %v428
    %v499 = vpack.c.b16 %v431, %v430
    %v500 = vpack.c.b16 %v433, %v432
    %v501 = vpack.c.b16 %v435, %v434
    %v502 = vpack.c.b16 %v437, %v436
    %v503 = vpack.c.b16 %v439, %v438
    %v504 = vpack.c.b16 %v441, %v440
    %v505 = vpack.c.b16 %v443, %v442
    %v506 = vpack.c.b16 %v445, %v444
    %v507 = vpack.c.b16 %v447, %v446
    %v508 = vpack.c.b16 %v449, %v448
    %v509 = vpack.c.b16 %v451, %v450
    %v510 = vpack.c.b16 %v453, %v452
    %v511 = vpack.c.b16 %v455, %v454
    %v512 = vpack.c.b16 %v457, %v456
    %v513 = vpack.c.b16 %v459, %v458
    %v514 = vpack.c.b16 %v461, %v460
    %v515 = vpack.c.b16 %v463, %v462
    %v516 = vpack.c.b16 %v465, %v464
    %v517 = vpack.c.b16 %v467, %v466
    %v518 = vpack.c.b16 %v469, %v468
    %v519 = vpack.c.b16 %v471, %v470
    %568 = vmatprep.subr.bf16.mxu0 0
    %569 = vmatpush1.bf16.msra.mxu0 %v472
    %570 = vmatprep.subr.bf16.mxu0 0
    %571 = vmatpush1.bf16.msra.mxu0 %v473
    %572 = vmatprep.subr.bf16.mxu0 0
    %573 = vmatpush1.bf16.msra.mxu0 %v474
    %574 = vmatprep.subr.bf16.mxu0 0
    %575 = vmatpush1.bf16.msra.mxu0 %v475
    %576 = vmatprep.subr.bf16.mxu0 0
    %577 = vmatpush1.bf16.msra.mxu0 %v476
    %578 = vmatprep.subr.bf16.mxu0 0
    %579 = vmatpush1.bf16.msra.mxu0 %v477
    %580 = vmatprep.subr.bf16.mxu0 0
    %581 = vmatpush1.bf16.msra.mxu0 %v478
    %582 = vmatprep.subr.bf16.mxu0 0
    %583 = vmatpush1.bf16.msra.mxu0 %v479
    %584 = vmatprep.subr.bf16.mxu0 0
    %585 = vmatpush1.bf16.msra.mxu0 %v480
    %586 = vmatprep.subr.bf16.mxu0 0
    %587 = vmatpush1.bf16.msra.mxu0 %v481
    %588 = vmatprep.subr.bf16.mxu0 0
    %589 = vmatpush1.bf16.msra.mxu0 %v482
    %590 = vmatprep.subr.bf16.mxu0 0
    %591 = vmatpush1.bf16.msra.mxu0 %v483
    %592 = vmatprep.subr.bf16.mxu0 0
    %593 = vmatpush1.bf16.msra.mxu0 %v484
    %594 = vmatprep.subr.bf16.mxu0 0
    %595 = vmatpush1.bf16.msra.mxu0 %v485
    %596 = vmatprep.subr.bf16.mxu0 0
    %597 = vmatpush1.bf16.msra.mxu0 %v486
    %598 = vmatprep.subr.bf16.mxu0 0
    %599 = vmatpush1.bf16.msra.mxu0 %v487
    %600 = vmatprep.mubr.bf16.mxu0 %v269
    %601 = vmatmul.mubr.bf16.gmra.mrb[0].mxu0 %v268
    %v602 = vpop.f32.mrb[0].mxu0
    %v603 = vadd.f32 %v248, %v602
    %v604 = vpop.f32.mrb[0].mxu0
    %v605 = vpop.f32.mrb[0].mxu0
    %v606 = vadd.f32 %v248, %v605
    %v607 = vpop.f32.mrb[0].mxu0
    %608 = vdwg.mxu0
    %609 = vmatprep.subr.bf16.mxu0 0
    %610 = vmatpush1.bf16.msra.mxu0 %v488
    %611 = vmatprep.subr.bf16.mxu0 0
    %612 = vmatpush1.bf16.msra.mxu0 %v489
    %613 = vmatprep.subr.bf16.mxu0 0
    %614 = vmatpush1.bf16.msra.mxu0 %v490
    %615 = vmatprep.subr.bf16.mxu0 0
    %616 = vmatpush1.bf16.msra.mxu0 %v491
    %617 = vmatprep.subr.bf16.mxu0 0
    %618 = vmatpush1.bf16.msra.mxu0 %v492
    %619 = vmatprep.subr.bf16.mxu0 0
    %620 = vmatpush1.bf16.msra.mxu0 %v493
    %621 = vmatprep.subr.bf16.mxu0 0
    %622 = vmatpush1.bf16.msra.mxu0 %v494
    %623 = vmatprep.subr.bf16.mxu0 0
    %624 = vmatpush1.bf16.msra.mxu0 %v495
    %625 = vmatprep.subr.bf16.mxu0 0
    %626 = vmatpush1.bf16.msra.mxu0 %v496
    %627 = vmatprep.subr.bf16.mxu0 0
    %628 = vmatpush1.bf16.msra.mxu0 %v497
    %629 = vmatprep.subr.bf16.mxu0 0
    %630 = vmatpush1.bf16.msra.mxu0 %v498
    %631 = vmatprep.subr.bf16.mxu0 0
    %632 = vmatpush1.bf16.msra.mxu0 %v499
    %633 = vmatprep.subr.bf16.mxu0 0
    %634 = vmatpush1.bf16.msra.mxu0 %v500
    %635 = vmatprep.subr.bf16.mxu0 0
    %636 = vmatpush1.bf16.msra.mxu0 %v501
    %637 = vmatprep.subr.bf16.mxu0 0
    %638 = vmatpush1.bf16.msra.mxu0 %v502
    %639 = vmatprep.subr.bf16.mxu0 0
    %640 = vmatpush1.bf16.msra.mxu0 %v503
    %641 = vmatprep.mubr.bf16.mxu0 %v271
    %642 = vmatmul.mubr.bf16.gmra.mrb[0].mxu0 %v270
    %v643 = vpop.f32.mrb[0].mxu0
    %v644 = vadd.f32 %v603, %v643
    %v645 = vpop.f32.mrb[0].mxu0
    %v646 = vpop.f32.mrb[0].mxu0
    %v647 = vadd.f32 %v606, %v646
    %v648 = vpop.f32.mrb[0].mxu0
    %649 = vdwg.mxu0
    %650 = vmatprep.subr.bf16.mxu0 0
    %651 = vmatpush1.bf16.msra.mxu0 %v504
    %652 = vmatprep.subr.bf16.mxu0 0
    %653 = vmatpush1.bf16.msra.mxu0 %v505
    %654 = vmatprep.subr.bf16.mxu0 0
    %655 = vmatpush1.bf16.msra.mxu0 %v506
    %656 = vmatprep.subr.bf16.mxu0 0
    %657 = vmatpush1.bf16.msra.mxu0 %v507
    %658 = vmatprep.subr.bf16.mxu0 0
    %659 = vmatpush1.bf16.msra.mxu0 %v508
    %660 = vmatprep.subr.bf16.mxu0 0
    %661 = vmatpush1.bf16.msra.mxu0 %v509
    %662 = vmatprep.subr.bf16.mxu0 0
    %663 = vmatpush1.bf16.msra.mxu0 %v510
    %664 = vmatprep.subr.bf16.mxu0 0
    %665 = vmatpush1.bf16.msra.mxu0 %v511
    %666 = vmatprep.subr.bf16.mxu0 0
    %667 = vmatpush1.bf16.msra.mxu0 %v512
    %668 = vmatprep.subr.bf16.mxu0 0
    %669 = vmatpush1.bf16.msra.mxu0 %v513
    %670 = vmatprep.subr.bf16.mxu0 0
    %671 = vmatpush1.bf16.msra.mxu0 %v514
    %672 = vmatprep.subr.bf16.mxu0 0
    %673 = vmatpush1.bf16.msra.mxu0 %v515
    %674 = vmatprep.subr.bf16.mxu0 0
    %675 = vmatpush1.bf16.msra.mxu0 %v516
    %676 = vmatprep.subr.bf16.mxu0 0
    %677 = vmatpush1.bf16.msra.mxu0 %v517
    %678 = vmatprep.subr.bf16.mxu0 0
    %679 = vmatpush1.bf16.msra.mxu0 %v518
    %680 = vmatprep.subr.bf16.mxu0 0
    %681 = vmatpush1.bf16.msra.mxu0 %v519
    %682 = vmatprep.mubr.bf16.mxu0 %v273
    %683 = vmatmul.mubr.bf16.gmra.mrb[0].mxu0 %v272
    %v684 = vpop.f32.mrb[0].mxu0
    %v685 = vadd.f32 %v644, %v684
    %v686 = vpop.f32.mrb[0].mxu0
    %v687 = vpop.f32.mrb[0].mxu0
    %v688 = vadd.f32 %v647, %v687
    %v689 = vpop.f32.mrb[0].mxu0
    %690 = vdwg.mxu0
    %v691 = vmax.f32 %v685, 0.0
    %v692 = vmax.f32 %v688, 0.0
    %v693 = vld [vmem:[%s2] sm:$0xff]
    %v694 = vld [vmem:[%s2 + $0x8] sm:$0xff]
    %v695 = vld [vmem:[%s2 + $0x10] sm:$0xff]
    %v696 = vld [vmem:[%s2 + $0x18] sm:$0xff]
    %v697 = vld [vmem:[%s2 + $0x20] sm:$0xff]
    %v698 = vld [vmem:[%s2 + $0x28] sm:$0xff]
    %v699 = vld [vmem:[%s2 + $0x30] sm:$0xff]
    %v700 = vld [vmem:[%s2 + $0x38] sm:$0xff]
    %v701 = vld [vmem:[%s2 + $0x40] sm:$0xff]
    %v702 = vld [vmem:[%s2 + $0x48] sm:$0xff]
    %v703 = vld [vmem:[%s2 + $0x50] sm:$0xff]
    %v704 = vld [vmem:[%s2 + $0x58] sm:$0xff]
    %v705 = vld [vmem:[%s2 + $0x60] sm:$0xff]
    %v706 = vld [vmem:[%s2 + $0x68] sm:$0xff]
    %v707 = vld [vmem:[%s2 + $0x70] sm:$0xff]
    %v708 = vld [vmem:[%s2 + $0x78] sm:$0xff]
    %v709 = vld [vmem:[%s3] sm:$0x1]
    %v711 = vlaneseq
    %v712 = vshrl.u32 %v711, 7
    %v713 = vsub.s32 0, %v712
    %v714 = vrot.slane %v709, %v713
    %716 = vmatprep.subr.mxu0 0.0
    %717 = vmatpush1.msra.mxu0 %v693
    %718 = vmatprep.subr.mxu0 0.0
    %719 = vmatpush1.msra.mxu0 %v694
    %720 = vmatprep.subr.mxu0 0.0
    %721 = vmatpush1.msra.mxu0 %v695
    %722 = vmatprep.subr.mxu0 0.0
    %723 = vmatpush1.msra.mxu0 %v696
    %724 = vmatprep.subr.mxu0 0.0
    %725 = vmatpush1.msra.mxu0 %v697
    %726 = vmatprep.subr.mxu0 0.0
    %727 = vmatpush1.msra.mxu0 %v698
    %728 = vmatprep.subr.mxu0 0.0
    %729 = vmatpush1.msra.mxu0 %v699
    %730 = vmatprep.subr.mxu0 0.0
    %731 = vmatpush1.msra.mxu0 %v700
    %732 = vmatprep.subr.mxu0 0.0
    %733 = vmatpush1.msra.mxu0 %v701
    %734 = vmatprep.subr.mxu0 0.0
    %735 = vmatpush1.msra.mxu0 %v702
    %736 = vmatprep.subr.mxu0 0.0
    %737 = vmatpush1.msra.mxu0 %v703
    %738 = vmatprep.subr.mxu0 0.0
    %739 = vmatpush1.msra.mxu0 %v704
    %740 = vmatprep.subr.mxu0 0.0
    %741 = vmatpush1.msra.mxu0 %v705
    %742 = vmatprep.subr.mxu0 0.0
    %743 = vmatpush1.msra.mxu0 %v706
    %744 = vmatprep.subr.mxu0 0.0
    %745 = vmatpush1.msra.mxu0 %v707
    %746 = vmatprep.subr.mxu0 0.0
    %747 = vmatpush1.msra.mxu0 %v708
    %748 = vmatprep.subr.mxu0 0.0
    %749 = vmatpush1.msra.mxu0 0.0
    %750 = vmatprep.subr.mxu0 0.0
    %751 = vmatpush1.msra.mxu0 0.0
    %752 = vmatprep.subr.mxu0 0.0
    %753 = vmatpush1.msra.mxu0 0.0
    %754 = vmatprep.subr.mxu0 0.0
    %755 = vmatpush1.msra.mxu0 0.0
    %756 = vmatprep.subr.mxu0 0.0
    %757 = vmatpush1.msra.mxu0 0.0
    %758 = vmatprep.subr.mxu0 0.0
    %759 = vmatpush1.msra.mxu0 0.0
    %760 = vmatprep.subr.mxu0 0.0
    %761 = vmatpush1.msra.mxu0 0.0
    %762 = vmatprep.subr.mxu0 0.0
    %763 = vmatpush1.msra.mxu0 0.0
    %764 = vmatprep.subr.mxu0 0.0
    %765 = vmatpush1.msra.mxu0 0.0
    %766 = vmatprep.subr.mxu0 0.0
    %767 = vmatpush1.msra.mxu0 0.0
    %768 = vmatprep.subr.mxu0 0.0
    %769 = vmatpush1.msra.mxu0 0.0
    %770 = vmatprep.subr.mxu0 0.0
    %771 = vmatpush1.msra.mxu0 0.0
    %772 = vmatprep.subr.mxu0 0.0
    %773 = vmatpush1.msra.mxu0 0.0
    %774 = vmatprep.subr.mxu0 0.0
    %775 = vmatpush1.msra.mxu0 0.0
    %776 = vmatprep.subr.mxu0 0.0
    %777 = vmatpush1.msra.mxu0 0.0
    %778 = vmatprep.subr.mxu0 0.0
    %779 = vmatpush1.msra.mxu0 0.0
    %780 = vmatprep.mubr.f32.mxu0 0.0
    %781 = vmatmul.mubr.f32.gmra.mrb[0].mxu0 %v691
    %v782 = vpop.f32.mrb[0].mxu0
    %v783 = vadd.f32 %v714, %v782
    %v784 = vpop.f32.mrb[0].mxu0
    %785 = vmatprep.mubr.f32.mxu0 0.0
    %786 = vmatmul.mubr.f32.gmra.mrb[0].mxu0 %v692
    %v787 = vpop.f32.mrb[0].mxu0
    %v788 = vadd.f32 %v714, %v787
    %v789 = vpop.f32.mrb[0].mxu0
    %790 = vdwg.mxu0
    %vm791 = vcmask 23552
    %792 = vst.msk [vmem:[%s5] sm:$0xff] %vm791, %v783
    %793 = vst.msk [vmem:[%s5 + $0x8] sm:$0xff] %vm791, %v788
    // Predicated region
    $region26: #{classifier_forward_packed.2} parent=1 // pred_check
      _
    $region27: #{classifier_forward_packed.2} parent=1 // pred_check_branch
      %795 = sbr.rel (0) target = $region29
    $region28: #{classifier_forward_packed.2} parent=1 // pred_region
      _
    $region29: #{classifier_forward_packed.2} parent=1 // pred_fallthru
      _
    // Predicated region
    $region30: #{classifier_forward_packed.2} parent=1 // pred_check
      _
    $region31: #{classifier_forward_packed.2} parent=1 // pred_check_branch
      %797 = sbr.rel (0) target = $region33
    $region32: #{classifier_forward_packed.2} parent=1 // pred_region
      _
    $region33: #{classifier_forward_packed.2} parent=1 // pred_fallthru
      _
    %798 = vsyncpa [#allocation3], 1

</llo_original>
